<compile_context>
chip_gen: v5e
topology: v5e:2x2
jax: 0.10.0
libtpu: 0.0.40
codegen_flags: <defaults>
</compile_context>

<pallas_src>
import jax
import jax.numpy as jnp
from jax import lax
from jax.experimental import pallas as pl
from jax.experimental.pallas import tpu as pltpu


# ------------------------------- small helpers -------------------------------

def _r8(v):
    return ((v + 7) // 8) * 8


def _r128(v):
    return ((v + 127) // 128) * 128


def _physical_vmem_bytes():
    try:
        info = pltpu.get_tpu_info()
        return int(getattr(info, "vmem_capacity_bytes", 64 << 20))
    except Exception:
        return 64 << 20  # conservative (v7x has the smallest VMEM: 64 MiB)


# ---------------------------------- kernel -----------------------------------

def embed_kernel(patch_ref, w_ref, pos_ref, out_ref):
    # patch_ref: (bm, Np, K)  bf16  -- row 0 of each image is all zeros (cls slot)
    # w_ref:     (K, E_pad)   bf16
    # pos_ref:   (Np, E_pad)  f32   -- row 0 = cls_token, rows 1..N = pos + conv_b
    # out_ref:   (bm, N+1, E) out_dtype
    bm, np_, k = patch_ref.shape
    e_pad = w_ref.shape[1]
    n1 = out_ref.shape[1]      # N + 1
    e_out = out_ref.shape[2]   # E (unpadded)

    x = patch_ref[...].reshape(bm * np_, k)                  # layout-free: Np % 8 == 0
    y = jnp.dot(x, w_ref[...],
                preferred_element_type=jnp.float32)          # MXU, f32 accumulation
    y = y.reshape(bm, np_, e_pad) + pos_ref[...][None, :, :]  # cls row / pos+bias rows
    out_ref[...] = y[:, :n1, :e_out].astype(out_ref.dtype)   # single aligned store


# --------------------------------- wrapper ------------------------------------

def embed_layer_pallas(x_nchw, conv_w, conv_b, pos_embedding, cls_token,
                       patch_size, *, compute_dtype=jnp.bfloat16,
                       out_dtype=None, target_rows=512):
    """x_nchw: [B, C, H, W]. Returns [B, N+1, E] (cls token + patch embeddings)."""
    B, C, H, W = x_nchw.shape
    E = conv_w.shape[0]
    P = patch_size
    nH, nW = H // P, W // P
    N = nH * nW
    K = C * P * P
    if out_dtype is None:
        out_dtype = x_nchw.dtype

    Np = _r8(N + 1)        # cls row + N patch rows, padded to a sublane multiple
    E_pad = _r128(E)       # lane-aligned matmul columns

    # ---- patch extraction: NCHW -> [B, Np, K] with a leading zero row (cls slot).
    patches = x_nchw.reshape(B, C, nH, P, nW, P)
    patches = patches.transpose(0, 2, 4, 1, 3, 5).reshape(B, N, K)   # (c, ph, pw) order
    patches = jnp.pad(patches, ((0, 0), (1, Np - (N + 1)), (0, 0)))
    patches = patches.astype(compute_dtype)

    # Conv weight [E, C, P, P] -> [K, E_pad]; table = [cls_token; pos + conv_b].
    w_mat = jnp.pad(conv_w.reshape(E, K).T, ((0, 0), (0, E_pad - E)))
    w_mat = w_mat.astype(compute_dtype)
    pos_b = (pos_embedding.reshape(N, E).astype(jnp.float32)
             + conv_b.reshape(1, E).astype(jnp.float32))
    table = jnp.concatenate(
        [cls_token.reshape(1, E).astype(jnp.float32), pos_b], axis=0)
    table = jnp.pad(table, ((0, Np - (N + 1)), (0, E_pad - E)))

    cd_isz = jnp.dtype(compute_dtype).itemsize
    out_isz = jnp.dtype(out_dtype).itemsize
    K_l, E_l = _r128(K), _r128(E)

    # ---- VMEM-aware choice of images-per-step (bm). ----
    phys_vmem = _physical_vmem_bytes()
    budget = min(int(phys_vmem * 0.4), 32 << 20)

    resident = 2 * _r8(K) * E_pad * cd_isz + 2 * Np * E_pad * 4   # 2x-buffered w, table

    def vmem_need(bm):
        patch_blk = 2 * bm * Np * K_l * cd_isz           # double-buffered input tiles
        out_blk = 2 * bm * _r8(N + 1) * E_l * out_isz    # double-buffered output tiles
        tmp = 2 * bm * Np * E_pad * 4                    # f32 matmul result / staging
        return resident + patch_blk + out_blk + tmp

    bm = 1
    for d in range(1, B + 1):
        if B % d:
            continue
        if vmem_need(d) > budget:
            break
        bm = d
        if d * Np >= target_rows:   # ~512 rows / multi-MB DMAs per step on all gens
            break
    # Keep >= 2 grid steps when possible so both v7x TensorCores get work.
    if B > 1 and B // bm < 2:
        for d in range(bm - 1, 0, -1):
            if B % d == 0 and B // d >= 2:
                if 2 * d * Np >= min(target_rows, bm * Np):
                    bm = d
                break
    grid = (B // bm,)

    vmem_limit = int(min(max(2 * vmem_need(bm), 32 << 20), int(phys_vmem * 0.6)))

    cost = pl.CostEstimate(
        flops=2 * B * Np * K * E_pad,
        transcendentals=0,
        bytes_accessed=(patches.size * cd_isz + w_mat.size * cd_isz
                        + table.size * 4 + B * (N + 1) * E * out_isz))

    out = pl.pallas_call(
        embed_kernel,
        out_shape=jax.ShapeDtypeStruct((B, N + 1, E), out_dtype),
        grid_spec=pltpu.PrefetchScalarGridSpec(
            num_scalar_prefetch=0,
            grid=grid,
            in_specs=[
                pl.BlockSpec((bm, Np, K), lambda i: (i, 0, 0)),
                pl.BlockSpec((K, E_pad), lambda i: (0, 0)),
                pl.BlockSpec((Np, E_pad), lambda i: (0, 0)),
            ],
            out_specs=pl.BlockSpec((bm, N + 1, E), lambda i: (i, 0, 0)),
        ),
        compiler_params=pltpu.CompilerParams(
            dimension_semantics=("parallel",),
            vmem_limit_bytes=vmem_limit,
            allow_input_fusion=[True, False, False]),
        cost_estimate=cost,
    )(patches, w_mat, table)

    # No epilogue: the kernel writes the final [B, N+1, E] tensor directly.
    # TODO(synk): dropout(p=0.0) is identity and therefore elided.
    return out


# -------------------------------- reference -----------------------------------

def embed_layer_ref(x_nchw, conv_w, conv_b, pos_embedding, cls_token, patch_size):
    """Pure-JAX f32 reference mirroring the PyTorch module exactly."""
    B = x_nchw.shape[0]
    E = conv_w.shape[0]
    y = lax.conv_general_dilated(
        x_nchw, conv_w,
        window_strides=(patch_size, patch_size),
        padding="VALID",
        dimension_numbers=("NCHW", "OIHW", "NCHW"))          # [B, E, nH, nW]
    y = y + conv_b.reshape(1, E, 1, 1)
    y = y.reshape(B, E, -1).transpose(0, 2, 1)               # [B, N, E]
    y = y + pos_embedding                                    # [1, N, E]
    cls = jnp.broadcast_to(cls_token, (B, 1, E))
    return jnp.concatenate([cls, y], axis=1)                 # [B, N+1, E]


if __name__ == "__main__":
    def run_case(B, C, IMG, P, E):
        N = (IMG // P) ** 2
        key = jax.random.PRNGKey(0)
        kx, kw, kb, kpos, kcls = jax.random.split(key, 5)
        x = jax.random.normal(kx, (B, C, IMG, IMG), dtype=jnp.float32)
        conv_w = jax.random.normal(kw, (E, C, P, P), dtype=jnp.float32) * 0.05
        conv_b = jax.random.normal(kb, (E,), dtype=jnp.float32) * 0.05
        # Module __init__ zero-inits pos_embedding / cls_token; use small random
        # values so the add / cls paths are actually exercised.
        pos = jax.random.normal(kpos, (1, N, E), dtype=jnp.float32) * 0.02
        cls = jax.random.normal(kcls, (1, 1, E), dtype=jnp.float32) * 0.02

        out = embed_layer_pallas(x, conv_w, conv_b, pos, cls, P)
        out = jax.block_until_ready(out)
        ref = embed_layer_ref(x, conv_w, conv_b, pos, cls, P)
        assert out.shape == (B, N + 1, E), out.shape
        max_err = float(jnp.max(jnp.abs(out - ref)))
        # bf16 matmul operands (f32 accumulation) -> loosened tolerance vs f32 ref.
        assert jnp.allclose(out, ref, atol=2e-2, rtol=2e-2), max_err

    # Primary small config: B=2, C=4, image 16x16, patch 4 -> N=16, E=32.
    run_case(B=2, C=4, IMG=16, P=4, E=32)
    # Ragged config exercising (N+1) % 8 != 0 padding and image folding (bm>1).
    run_case(B=3, C=3, IMG=12, P=4, E=48)
    print("KERNEL_OK")
</pallas_src>

<mosaic_0001>
module attributes {stable_mosaic.version = 11 : i64} {
  func.func @embed_kernel(%arg0: i32, %arg1: memref<1x24x64xbf16, #tpu.memory_space<vmem>>, %arg2: memref<64x128xbf16, #tpu.memory_space<vmem>>, %arg3: memref<24x128xf32, #tpu.memory_space<vmem>>, %arg4: memref<1x17x32xf32, #tpu.memory_space<vmem>>) attributes {dimension_semantics = [#tpu.dimension_semantics<parallel>], iteration_bounds = array<i64: 2>, scalar_prefetch = 0 : i64, scratch_operands = 0 : i64, tpu.core_type = #tpu.core_type<tc>, window_params = [{transform_indices = @transform_0, window_bounds = array<i64: 1, 24, 64>}, {pipeline_mode = #tpu.pipeline_mode<synchronous>, transform_indices = @transform_1, window_bounds = array<i64: 64, 128>}, {pipeline_mode = #tpu.pipeline_mode<synchronous>, transform_indices = @transform_2, window_bounds = array<i64: 24, 128>}, {transform_indices = @transform_3, window_bounds = array<i64: 1, 17, 32>}]} {
    %c0 = arith.constant 0 : index
    %c0_0 = arith.constant 0 : index
    %c0_1 = arith.constant 0 : index
    %0 = vector.load %arg1[%c0, %c0_0, %c0_1] : memref<1x24x64xbf16, #tpu.memory_space<vmem>>, vector<1x24x64xbf16>
    %1 = vector.shape_cast %0 : vector<1x24x64xbf16> to vector<24x64xbf16>
    %c0_2 = arith.constant 0 : index
    %c0_3 = arith.constant 0 : index
    %2 = vector.load %arg2[%c0_2, %c0_3] : memref<64x128xbf16, #tpu.memory_space<vmem>>, vector<64x128xbf16>
    %cst = arith.constant dense<0.000000e+00> : vector<24x128xf32>
    %3 = tpu.matmul %1, %2, %cst {dimension_numbers = #tpu.dot_dimension_numbers<[1], [0], [0], [1], [0, 0, 1, 1], [], []>} : vector<24x64xbf16>, vector<64x128xbf16>, vector<24x128xf32> -> vector<24x128xf32>
    %4 = vector.shape_cast %3 : vector<24x128xf32> to vector<1x24x128xf32>
    %c0_4 = arith.constant 0 : index
    %c0_5 = arith.constant 0 : index
    %5 = vector.load %arg3[%c0_4, %c0_5] : memref<24x128xf32, #tpu.memory_space<vmem>>, vector<24x128xf32>
    %6 = vector.shape_cast %5 : vector<24x128xf32> to vector<1x24x128xf32>
    %7 = arith.addf %4, %6 : vector<1x24x128xf32>
    %8 = vector.extract_strided_slice %7 {offsets = [0, 0, 0], sizes = [1, 17, 32], strides = [1, 1, 1]} : vector<1x24x128xf32> to vector<1x17x32xf32>
    %c0_6 = arith.constant 0 : index
    %c0_7 = arith.constant 0 : index
    %c0_8 = arith.constant 0 : index
    %9 = vector.load %arg4[%c0_6, %c0_7, %c0_8] : memref<1x17x32xf32, #tpu.memory_space<vmem>>, vector<1x17x32xf32>
    tpu.vector_store %arg4[%c0_6, %c0_7, %c0_8], %8 {strides = array<i32>} : memref<1x17x32xf32, #tpu.memory_space<vmem>>, vector<1x17x32xf32>,
    return
  }
  func.func @transform_0(%arg0: i32) -> (i32, i32, i32) {
    %c0_i32 = arith.constant 0 : i32
    %c0_i32_0 = arith.constant 0 : i32
    %c0_i32_1 = arith.constant 0 : i32
    return %arg0, %c0_i32, %c0_i32_0 : i32, i32, i32
  }
  func.func @transform_1(%arg0: i32) -> (i32, i32) {
    %c0_i32 = arith.constant 0 : i32
    %c0_i32_0 = arith.constant 0 : i32
    %c0_i32_1 = arith.constant 0 : i32
    return %c0_i32, %c0_i32_0 : i32, i32
  }
  func.func @transform_2(%arg0: i32) -> (i32, i32) {
    %c0_i32 = arith.constant 0 : i32
    %c0_i32_0 = arith.constant 0 : i32
    %c0_i32_1 = arith.constant 0 : i32
    return %c0_i32, %c0_i32_0 : i32, i32
  }
  func.func @transform_3(%arg0: i32) -> (i32, i32, i32) {
    %c0_i32 = arith.constant 0 : i32
    %c0_i32_0 = arith.constant 0 : i32
    %c0_i32_1 = arith.constant 0 : i32
    return %arg0, %c0_i32, %c0_i32_0 : i32, i32, i32
  }
}

</mosaic_0001>

<llo_original>
// kernel: tpu_custom_call.1
$region0: #{tpu_custom_call.1}
  #allocation0 [shape = 'u32[]', space=smem, size = 0x4, offset = 0x4, fixed_abs, tag = 'smem constant byte address 0x4 - core index']
  #allocation1 [shape = 'u32[72,128]{1,0:T(1,128)}', space=vmem, size = 0x9000, scoped, tag = 'internal scratch']
  %s0 = inlined_call_operand.hbm [shape: bf16[2,24,64], index: 0, kind: input, shape index: {}]
  %s1 = inlined_call_operand.hbm [shape: bf16[64,128], index: 1, kind: input, shape index: {}]
  %s2 = inlined_call_operand.hbm [shape: f32[24,128], index: 2, kind: input, shape index: {}]
  %s3 = inlined_call_operand.vmem [shape: f32[2,17,32], index: 3, kind: output, shape index: {}]
  %s4 = sld [smem:[#allocation0]]
  $region57: #{tpu_custom_call.1} parent=0
    _
  %s6 = ssub.s32 1, %s4
  %s7 = scalar_select 0, %s6, %s4
  $region1: #{tpu_custom_call.1} parent=0
    #allocation2 [shape = 'u8[12288]{0}', space=vmem, size = 0x3000, scoped, tag = 'input window, operand 0']
    #allocation3 [shape = 's32[2]{0}', space=sflag, size = 0x8, scoped, tag = 'scoped memory for tpu_custom_call.1']
    #allocation4 [shape = 'u8[16384]{0}', space=vmem, size = 0x4000, scoped, tag = 'input window, operand 1, single buffered']
    #allocation5 [shape = 's32[1]{0}', space=sflag, size = 0x4, scoped, tag = 'scoped memory for tpu_custom_call.1']
    #allocation6 [shape = 'u8[12288]{0}', space=vmem, size = 0x3000, scoped, tag = 'input window, operand 2, single buffered']
    %8 = vsyncpa [#allocation3], 0
    %s9 = scalar_lea.sflag [#allocation3], 1
    %10 = vsyncpa %s9, 0
    %11 = vsyncpa [#allocation5], 0
    loop: start=0, step=1, limit=4
    $region2: #{tpu_custom_call.1} parent=1 // loop_pre_header
      _
    $region3: #{tpu_custom_call.1} parent=1 // loop_header
      %s13 = sphi 0, %s17
      %p14 = scmp.ge.s32.totalorder %s13, 4
      %s23 = sphi 0, %s25
      %s26 = sphi 0, %s23
      %s27 = sphi 0, %s26
      %s43 = sphi 0, %s27
      %s47 = sphi 0, %s47
      %s49 = sphi 0, %s47
      %s50 = sphi 0, %s49
      %s64 = sphi 0, %s50
      %s68 = sphi 0, %s68
      %s70 = sphi 0, %s68
      %s71 = sphi 0, %s70
      %s85 = sphi 0, %s71
      %s91 = sphi 0, %s93
      %s94 = sphi 0, %s91
      %s95 = sphi 0, %s94
      %s111 = sphi 0, %s95
    $region4: #{tpu_custom_call.1} parent=1 // loop_header_branch
      %16 = sbr.rel (%p14) target = $region8
    $region5: #{tpu_custom_call.1} parent=1 // loop_body
      %s18 = ssub.s32 %s13, 1
      %s19 = ssub.s32 %s13, 2
      %s20 = sadd.s32 %s13, 1
      %s21 = ssub.s32 %s13, %s20
      %p22 = scmp.eq.s32.totalorder %s21, 0
      %s24 = sadd.s32 %s23, 1
      %s25 = scalar_select %p22, %s23, %s24
      %p28 = pneg %p22
      %p29 = scmp.eq.s32.totalorder %s13, 1
      %p30 = por %p28, %p29
      %p31 = scmp.ne.s32.totalorder %s23, %s26
      %p32 = scmp.eq.s32.totalorder %s13, 0
      %p33 = por %p31, %p32
      %p34 = scmp.ne.s32.totalorder %s23, %s26
      %p35 = scmp.eq.s32.totalorder %s18, 1
      %p36 = por %p34, %p35
      %p37 = scmp.ne.s32.totalorder %s26, %s27
      %p38 = scmp.eq.s32.totalorder %s18, 0
      %p39 = por %p37, %p38
      %p40 = scmp.ne.s32.totalorder %s26, %s27
      %p41 = scmp.eq.s32.totalorder %s19, 1
      %p42 = por %p40, %p41
      %p44 = scmp.ne.s32.totalorder %s27, %s43
      %p45 = scmp.eq.s32.totalorder %s19, 0
      %p46 = por %p44, %p45
      %s48 = sadd.s32 %s47, 1
      %p51 = scmp.eq.s32.totalorder %s13, 1
      %p52 = scmp.ne.s32.totalorder %s47, %s49
      %p53 = scmp.eq.s32.totalorder %s13, 0
      %p54 = por %p52, %p53
      %p55 = scmp.ne.s32.totalorder %s47, %s49
      %p56 = scmp.eq.s32.totalorder %s18, 1
      %p57 = por %p55, %p56
      %p58 = scmp.ne.s32.totalorder %s49, %s50
      %p59 = scmp.eq.s32.totalorder %s18, 0
      %p60 = por %p58, %p59
      %p61 = scmp.ne.s32.totalorder %s49, %s50
      %p62 = scmp.eq.s32.totalorder %s19, 1
      %p63 = por %p61, %p62
      %p65 = scmp.ne.s32.totalorder %s50, %s64
      %p66 = scmp.eq.s32.totalorder %s19, 0
      %p67 = por %p65, %p66
      %s69 = sadd.s32 %s68, 1
      %p72 = scmp.eq.s32.totalorder %s13, 1
      %p73 = scmp.ne.s32.totalorder %s68, %s70
      %p74 = scmp.eq.s32.totalorder %s13, 0
      %p75 = por %p73, %p74
      %p76 = scmp.ne.s32.totalorder %s68, %s70
      %p77 = scmp.eq.s32.totalorder %s18, 1
      %p78 = por %p76, %p77
      %p79 = scmp.ne.s32.totalorder %s70, %s71
      %p80 = scmp.eq.s32.totalorder %s18, 0
      %p81 = por %p79, %p80
      %p82 = scmp.ne.s32.totalorder %s70, %s71
      %p83 = scmp.eq.s32.totalorder %s19, 1
      %p84 = por %p82, %p83
      %p86 = scmp.ne.s32.totalorder %s71, %s85
      %p87 = scmp.eq.s32.totalorder %s19, 0
      %p88 = por %p86, %p87
      %s89 = ssub.s32 %s13, %s20
      %p90 = scmp.eq.s32.totalorder %s89, 0
      %s92 = sadd.s32 %s91, 1
      %s93 = scalar_select %p90, %s91, %s92
      %p96 = pneg %p90
      %p97 = scmp.eq.s32.totalorder %s13, 1
      %p98 = por %p96, %p97
      %p99 = scmp.ne.s32.totalorder %s91, %s94
      %p100 = scmp.eq.s32.totalorder %s13, 0
      %p101 = por %p99, %p100
      %p102 = scmp.ne.s32.totalorder %s91, %s94
      %p103 = scmp.eq.s32.totalorder %s18, 1
      %p104 = por %p102, %p103
      %p105 = scmp.ne.s32.totalorder %s94, %s95
      %p106 = scmp.eq.s32.totalorder %s18, 0
      %p107 = por %p105, %p106
      %p108 = scmp.ne.s32.totalorder %s94, %s95
      %p109 = scmp.eq.s32.totalorder %s19, 1
      %p110 = por %p108, %p109
      %p112 = scmp.ne.s32.totalorder %s95, %s111
      %p113 = scmp.eq.s32.totalorder %s19, 0
      %p114 = por %p112, %p113
      %p115 = scmp.le.s32.totalorder 1, %s13
      %p116 = scmp.lt.s32.totalorder %s13, 3
      %p117 = pnand %p115, %p116
      %p118 = pneg %p117
      // Predicated region
      $region9: #{tpu_custom_call.1} parent=5 // pred_check
        _
      $region10: #{tpu_custom_call.1} parent=5 // pred_check_branch
        %120 = sbr.rel (%p117) target = $region12
      $region11: #{tpu_custom_call.1} parent=5 // pred_region
        %s121 = ssub.s32 %s13, 1
        // Predicated region
        $region13: #{tpu_custom_call.1} parent=11 // pred_check
          %p122 = pneg %p60
        $region14: #{tpu_custom_call.1} parent=11 // pred_check_branch
          %124 = sbr.rel (%p122) target = $region16
        $region15: #{tpu_custom_call.1} parent=11 // pred_region
          %126 = vsyncadd [#allocation5], 0
          %s127 = sshll.u32 %s1, 4
          %s128 = int_to_ptr.hbm [resolvable:$true] %s127
          %s129 = sshll.u32 [#allocation4], 4
          %s130 = int_to_ptr.vmem [resolvable:$true] %s129
          %135 = dma.hbm_to_vmem [thread:$0]  %s128, 512, %s130, [#allocation5], 64, 64, 4
        $region16: #{tpu_custom_call.1} parent=11 // pred_fallthru
          _
        // Predicated region
        $region17: #{tpu_custom_call.1} parent=11 // pred_check
          %p136 = pneg %p81
        $region18: #{tpu_custom_call.1} parent=11 // pred_check_branch
          %138 = sbr.rel (%p136) target = $region20
        $region19: #{tpu_custom_call.1} parent=11 // pred_region
          %140 = vsyncadd [#allocation5], 0
          %s141 = sshll.u32 %s2, 4
          %s142 = int_to_ptr.hbm [resolvable:$true] %s141
          %s143 = sshll.u32 [#allocation6], 4
          %s144 = int_to_ptr.vmem [resolvable:$true] %s143
          %149 = dma.hbm_to_vmem [thread:$0]  %s142, 384, %s144, [#allocation5], 128, 128, 8
        $region20: #{tpu_custom_call.1} parent=11 // pred_fallthru
          _
      $region12: #{tpu_custom_call.1} parent=5 // pred_fallthru
        _
      %p150 = scmp.lt.s32.totalorder %s13, 2
      // Predicated region
      $region21: #{tpu_custom_call.1} parent=5 // pred_check
        %p151 = pneg %p150
      $region22: #{tpu_custom_call.1} parent=5 // pred_check_branch
        %153 = sbr.rel (%p151) target = $region24
      $region23: #{tpu_custom_call.1} parent=5 // pred_region
        // Predicated region
        $region25: #{tpu_custom_call.1} parent=23 // pred_check
          %p154 = pneg %p33
        $region26: #{tpu_custom_call.1} parent=23 // pred_check_branch
          %156 = sbr.rel (%p154) target = $region28
        $region27: #{tpu_custom_call.1} parent=23 // pred_region
          %s157 = sand.u32 %s23, 1
          %s158 = scalar_lea.sflag [#allocation3], %s157
          %s159 = sand.u32 %s23, 1
          %s160 = smul.addr %s159, 12
          %s161 = scalar_lea.vmem [#allocation2], %s160
          %163 = vsyncadd %s158, 0
          %s164 = smul.addr %s13, 3
          %s165 = smul.addr %s164, 4
          %s166 = scalar_lea.hbm %s0, %s165
          %s167 = sshll.u32 %s166, 4
          %s168 = int_to_ptr.hbm [resolvable:$true] %s167
          %s169 = sshll.u32 %s161, 4
          %s170 = int_to_ptr.vmem [resolvable:$true] %s169
          %175 = dma.hbm_to_vmem [thread:$0]  %s168, 192, %s170, %s158, 64, 64, 4
        $region28: #{tpu_custom_call.1} parent=23 // pred_fallthru
          _
      $region24: #{tpu_custom_call.1} parent=5 // pred_fallthru
        _
      %p176 = scmp.le.s32.totalorder 1, %s13
      %p177 = scmp.lt.s32.totalorder %s13, 3
      %p178 = pnand %p176, %p177
      %p179 = pneg %p178
      // Predicated region
      $region29: #{tpu_custom_call.1} parent=5 // pred_check
        _
      $region30: #{tpu_custom_call.1} parent=5 // pred_check_branch
        %181 = sbr.rel (%p178) target = $region32
      $region31: #{tpu_custom_call.1} parent=5 // pred_region
        %s182 = ssub.s32 %s13, 1
        %s183 = sand.u32 %s26, 1
        %s184 = scalar_lea.sflag [#allocation3], %s183
        %s185 = sand.u32 %s26, 1
        %s186 = smul.addr %s185, 12
        %s187 = scalar_lea.vmem [#allocation2], %s186
        // Predicated region
        $region33: #{tpu_custom_call.1} parent=31 // pred_check
          %p188 = pneg %p39
        $region34: #{tpu_custom_call.1} parent=31 // pred_check_branch
          %190 = sbr.rel (%p188) target = $region36
        $region35: #{tpu_custom_call.1} parent=31 // pred_region
          %192 = dma.done %s184, 192
        $region36: #{tpu_custom_call.1} parent=31 // pred_fallthru
          _
        // Predicated region
        $region37: #{tpu_custom_call.1} parent=31 // pred_check
          %p193 = pneg %p60
        $region38: #{tpu_custom_call.1} parent=31 // pred_check_branch
          %195 = sbr.rel (%p193) target = $region40
        $region39: #{tpu_custom_call.1} parent=31 // pred_region
          %197 = dma.done [#allocation5], 512
        $region40: #{tpu_custom_call.1} parent=31 // pred_fallthru
          _
        // Predicated region
        $region41: #{tpu_custom_call.1} parent=31 // pred_check
          %p198 = pneg %p81
        $region42: #{tpu_custom_call.1} parent=31 // pred_check_branch
          %200 = sbr.rel (%p198) target = $region44
        $region43: #{tpu_custom_call.1} parent=31 // pred_region
          %202 = dma.done [#allocation5], 384
        $region44: #{tpu_custom_call.1} parent=31 // pred_fallthru
          _
        %s203 = sand.u32 %s26, 1
        %s204 = scalar_lea.sflag [#allocation3], %s203
        %s205 = sand.u32 %s26, 1
        %s206 = smul.addr %s205, 12
        %s207 = scalar_lea.vmem [#allocation2], %s206
        %p208 = pneg %p39
        %p209 = pneg %p36
        %p210 = pneg %p60
        %p211 = pneg %p57
        %p212 = pneg %p81
        %p213 = pneg %p78
        %p214 = pneg %p107
        %p215 = pneg %p104
        %p216 = scmp.lt.s32.totalorder %s18, 1
        %s217 = scalar_select %p216, %s18, 1
        %s218 = smul.addr %s217, 3
        %s219 = smul.addr %s218, 8
        %s220 = scalar_lea.vmem %s3, %s219
        %p221 = scmp.lt.s32.totalorder %s18, 1
        %s222 = scalar_select %p221, %s18, 1
        %s223 = smul.addr %s222, 3
        %s224 = smul.addr %s223, 8
        %s225 = scalar_lea.vmem %s3, %s224
        %v227 = vld [vmem:[%s187] sm:$0xf]
        %v228 = vld [vmem:[%s187 + $0x4] sm:$0xf]
        %v229 = vld [vmem:[%s187 + $0x8] sm:$0xf]
        %v230 = vld [vmem:[#allocation4] sm:$0xf]
        %v231 = vld [vmem:[#allocation4 + $0x4] sm:$0xf]
        %v232 = vld [vmem:[#allocation4 + $0x8] sm:$0xf]
        %v233 = vld [vmem:[#allocation4 + $0xc] sm:$0xf]
        %v234 = vld [vmem:[#allocation4 + $0x10] sm:$0xf]
        %v235 = vld [vmem:[#allocation4 + $0x14] sm:$0xf]
        %v236 = vld [vmem:[#allocation4 + $0x18] sm:$0xf]
        %v237 = vld [vmem:[#allocation4 + $0x1c] sm:$0xf]
        %v241 = vunpack.c.l.b16 %v227
        %v242 = vunpack.c.l.b16 %v228
        %v243 = vunpack.c.l.b16 %v229
        %v244 = vpack.c.b16 %v242, %v241
        %v245 = vpack.c.b16 %v243, %v243
        %v254 = vunpack.c.l.b16 %v230
        %v255 = vunpack.c.l.b16 %v231
        %v256 = vunpack.c.l.b16 %v232
        %v257 = vunpack.c.l.b16 %v233
        %v258 = vunpack.c.l.b16 %v234
        %v259 = vunpack.c.l.b16 %v235
        %v260 = vunpack.c.l.b16 %v236
        %v261 = vunpack.c.l.b16 %v237
        %v262 = vpack.c.b16 %v255, %v254
        %v263 = vpack.c.b16 %v257, %v256
        %v264 = vpack.c.b16 %v259, %v258
        %v265 = vpack.c.b16 %v261, %v260
        %vm270 = vcmask 523264
        %v272 = vsel %vm270, %v244, 0
        %v275 = vsel %vm270, %v245, 0
        %277 = vmatpush.bf16.msra.mxu0 0
        %278 = vmatpush.bf16.msra.mxu0 0
        %279 = vmatpush.bf16.msra.mxu0 0
        %280 = vmatpush.bf16.msra.mxu0 0
        %281 = vmatpush.bf16.msra.mxu0 %v265
        %282 = vmatpush.bf16.msra.mxu0 %v264
        %283 = vmatpush.bf16.msra.mxu0 %v263
        %284 = vmatpush.bf16.msra.mxu0 %v262
        %285 = vmatmul.bf16.gmra.mxu0 %v272
        %v286 = vpop.f32.mrf.mxu0
        %v287 = vadd.f32 0.0, %v286
        %v288 = vpop.f32.mrf.mxu0
        %v289 = vadd.f32 0.0, %v288
        %290 = vmatmul.bf16.gmra.mxu0 %v275
        %v291 = vpop.f32.mrf.mxu0
        %v292 = vadd.f32 0.0, %v291
        %v293 = vpop.f32.mrf.mxu0
        %294 = vdwg.mxu0
        %v295 = vld [vmem:[#allocation6] sm:$0xff]
        %v296 = vld [vmem:[#allocation6 + $0x8] sm:$0xff]
        %v297 = vld [vmem:[#allocation6 + $0x10] sm:$0xff]
        %v298 = vadd.f32 %v287, %v295
        %v299 = vadd.f32 %v289, %v296
        %v300 = vadd.f32 %v292, %v297
        %vm301 = vcmask 261120
        %302 = vst.msk [vmem:[%s225] sm:$0xff] %vm301, %v298
        %303 = vst.msk [vmem:[%s225 + $0x8] sm:$0xff] %vm301, %v299
        %vm304 = vcmask 253952
        %305 = vst.msk [vmem:[%s225 + $0x10] sm:$0x1] %vm304, %v300
        %p306 = scmp.lt.s32.totalorder %s18, 1
        %s307 = scalar_select %p306, %s18, 1
        %s308 = smul.addr %s307, 3
        %s309 = smul.addr %s308, 8
        %s310 = scalar_lea.vmem %s3, %s309
        // Predicated region
        $region45: #{tpu_custom_call.1} parent=31 // pred_check
          %p311 = pneg %p104
        $region46: #{tpu_custom_call.1} parent=31 // pred_check_branch
          %313 = sbr.rel (%p311) target = $region48
        $region47: #{tpu_custom_call.1} parent=31 // pred_region
          _
        $region48: #{tpu_custom_call.1} parent=31 // pred_fallthru
          _
      $region32: #{tpu_custom_call.1} parent=5 // pred_fallthru
        _
      %p314 = scmp.le.s32.totalorder 2, %s13
      // Predicated region
      $region49: #{tpu_custom_call.1} parent=5 // pred_check
        %p315 = pneg %p314
      $region50: #{tpu_custom_call.1} parent=5 // pred_check_branch
        %317 = sbr.rel (%p315) target = $region52
      $region51: #{tpu_custom_call.1} parent=5 // pred_region
        %s318 = ssub.s32 %s13, 2
        // Predicated region
        $region53: #{tpu_custom_call.1} parent=51 // pred_check
          %p319 = pneg %p110
        $region54: #{tpu_custom_call.1} parent=51 // pred_check_branch
          %321 = sbr.rel (%p319) target = $region56
        $region55: #{tpu_custom_call.1} parent=51 // pred_region
          %p322 = scmp.lt.s32.totalorder %s19, 1
          %s323 = scalar_select %p322, %s19, 1
          %s324 = smul.addr %s323, 3
          %s325 = smul.addr %s324, 8
          %s326 = scalar_lea.vmem %s3, %s325
        $region56: #{tpu_custom_call.1} parent=51 // pred_fallthru
          _
      $region52: #{tpu_custom_call.1} parent=5 // pred_fallthru
        _
    $region6: #{tpu_custom_call.1} parent=1 // loop_footer
      %s17 = sadd.s32 1, %s13
    $region7: #{tpu_custom_call.1} parent=1 // loop_footer_branch
      %12 = sbr.rel target = $region3
    $region8: #{tpu_custom_call.1} parent=1 // loop_exit
      _
    %327 = vsyncpa [#allocation3], 1
    %s328 = scalar_lea.sflag [#allocation3], 1
    %329 = vsyncpa %s328, 1
    %330 = vsyncpa [#allocation5], 1

</llo_original>
